<compile_context>
chip_gen: v7x
topology: tpu7x:2x2x1
jax: 0.10.0
libtpu: 0.0.40
codegen_flags: <defaults>
</compile_context>

<pallas_src>
import functools

import jax
import jax.numpy as jnp
from jax.experimental import pallas as pl
from jax.experimental.pallas import tpu as pltpu

IN_DIM = 100
HID_DIM = 100
OUT_DIM = 10

HID_PAD = 128              # lane-aligned hidden width (zero padding is exact: ReLU(0)=0)

DEFAULT_TILE_B = 2048      # rows per grid step (multiple of 8)
_MIN_SPLIT_TILE = 256      # keep >=2 grid steps (megacore) once B reaches 2*this


def _round_up(n: int, m: int) -> int:
    return ((n + m - 1) // m) * m


def _encoder_kernel(x_ref, w1_ref, b1_ref, w2_ref, b2_ref, w3_ref, b3_ref, o_ref):
    # x_ref: (tb, 100) f32   w1: (100,128) bf16   w2: (128,128) bf16   w3: (128,10) bf16
    # b1/b2: (1,128) f32     b3: (1,10) f32       o_ref: (tb, 10) f32
    x = x_ref[...].astype(jnp.bfloat16)            # in-kernel cast (VPU has slack)

    h1 = jnp.dot(x, w1_ref[...], preferred_element_type=jnp.float32) + b1_ref[...]
    h1 = jnp.maximum(h1, 0.0)

    h2 = jnp.dot(h1.astype(jnp.bfloat16), w2_ref[...],
                 preferred_element_type=jnp.float32) + b2_ref[...]
    h2 = jnp.maximum(h2, 0.0)

    h3 = jnp.dot(h2.astype(jnp.bfloat16), w3_ref[...],
                 preferred_element_type=jnp.float32) + b3_ref[...]
    h3 = jnp.maximum(h3, 0.0)

    o_ref[...] = h3.astype(o_ref.dtype)


def _pad_params(params):
    """Zero-pad weights/biases to lane-friendly shapes; weights -> bf16, biases stay f32."""
    w1, b1, w2, b2, w3, b3 = params

    w1p = jnp.zeros((IN_DIM, HID_PAD), jnp.float32).at[:, :HID_DIM].set(w1).astype(jnp.bfloat16)
    b1p = jnp.zeros((1, HID_PAD), jnp.float32).at[:, :HID_DIM].set(b1)

    w2p = jnp.zeros((HID_PAD, HID_PAD), jnp.float32).at[:HID_DIM, :HID_DIM].set(w2).astype(jnp.bfloat16)
    b2p = jnp.zeros((1, HID_PAD), jnp.float32).at[:, :HID_DIM].set(b2)

    w3p = jnp.zeros((HID_PAD, OUT_DIM), jnp.float32).at[:HID_DIM, :].set(w3).astype(jnp.bfloat16)
    b3p = b3.astype(jnp.float32)                                   # (1, 10)

    return w1p, b1p, w2p, b2p, w3p, b3p


@functools.partial(jax.jit, static_argnames=("tile_b",))
def encoder_forward(x, params, tile_b: int = DEFAULT_TILE_B):
    """x: (B, 100) float32 -> (B, 10) float32."""
    B = x.shape[0]
    tile_b = max(8, _round_up(tile_b, 8))

    # Batch tile: large enough to amortize per-step overhead, but split into >=~4
    # steps for big batches so megacore (v7x) can shard the "parallel" axis.
    if B <= tile_b and B < 2 * _MIN_SPLIT_TILE:
        tb = B                                   # single full-extent block (always legal)
    else:
        tb = min(tile_b, max(_MIN_SPLIT_TILE, _round_up(-(-B // 4), 8)))
        tb = _round_up(tb, 8)
    grid = (pl.cdiv(B, tb),)                     # partial last block handled by Pallas

    w1, b1, w2, b2, w3, b3 = _pad_params(params)

    const = lambda shape: pl.BlockSpec(shape, lambda i: (0, 0))  # VMEM-resident params

    flops = 2 * B * (IN_DIM * HID_PAD + HID_PAD * HID_PAD + HID_PAD * OUT_DIM)
    bytes_accessed = (
        B * IN_DIM * 4                                            # x read (f32)
        + B * OUT_DIM * 4                                         # out write (f32, narrow)
        + (IN_DIM * HID_PAD + HID_PAD * HID_PAD + HID_PAD * OUT_DIM) * 2  # bf16 weights
        + (2 * HID_PAD + OUT_DIM) * 4                             # f32 biases
    )

    out = pl.pallas_call(
        _encoder_kernel,
        out_shape=jax.ShapeDtypeStruct((B, OUT_DIM), jnp.float32),
        grid=grid,
        in_specs=[
            pl.BlockSpec((tb, IN_DIM), lambda i: (i, 0)),         # streamed batch tile
            const((IN_DIM, HID_PAD)), const((1, HID_PAD)),
            const((HID_PAD, HID_PAD)), const((1, HID_PAD)),
            const((HID_PAD, OUT_DIM)), const((1, OUT_DIM)),
        ],
        out_specs=pl.BlockSpec((tb, OUT_DIM), lambda i: (i, 0)),  # narrow writeback
        compiler_params=pltpu.CompilerParams(
            dimension_semantics=("parallel",),                    # megacore on v7x
        ),
        cost_estimate=pl.CostEstimate(
            flops=flops, transcendentals=0, bytes_accessed=bytes_accessed
        ),
    )(x, w1, b1, w2, b2, w3, b3)

    return out


def init_params(key):
    """nn.Linear-style init: U(-1/sqrt(fan_in), 1/sqrt(fan_in)).

    Weights stored as (in_features, out_features) (transposed vs PyTorch), so the
    kernel computes y = x @ W + b (== torch's x @ W.T + b).
    """
    ks = jax.random.split(key, 6)

    def lin(kw, kb, fan_in, fan_out):
        bound = 1.0 / jnp.sqrt(fan_in)
        w = jax.random.uniform(kw, (fan_in, fan_out), jnp.float32, -bound, bound)
        b = jax.random.uniform(kb, (1, fan_out), jnp.float32, -bound, bound)
        return w, b

    w1, b1 = lin(ks[0], ks[1], IN_DIM, HID_DIM)
    w2, b2 = lin(ks[2], ks[3], HID_DIM, HID_DIM)
    w3, b3 = lin(ks[4], ks[5], HID_DIM, OUT_DIM)
    return (w1, b1, w2, b2, w3, b3)


def reference_forward(x, params):
    w1, b1, w2, b2, w3, b3 = params
    h = jnp.maximum(x @ w1 + b1, 0.0)
    h = jnp.maximum(h @ w2 + b2, 0.0)
    h = jnp.maximum(h @ w3 + b3, 0.0)
    return h   # Dropout(p=0.0) is the identity.


if __name__ == "__main__":
    key = jax.random.PRNGKey(0)
    k_x, k_p = jax.random.split(key)

    B = 8
    x = jax.random.normal(k_x, (B, IN_DIM), jnp.float32)
    params = init_params(k_p)

    out = encoder_forward(x, params)
    out = jax.block_until_ready(out)

    ref = reference_forward(x, params)
    assert out.shape == (B, OUT_DIM), out.shape
    # bf16 MXU operands (f32 accumulation) -> loosened tolerance vs f32 reference.
    assert jnp.allclose(out, ref, atol=3e-2, rtol=3e-2), "mismatch vs JAX reference"

    print("KERNEL_OK")
</pallas_src>

<mosaic_0001>
module attributes {stable_mosaic.version = 11 : i64} {
  func.func @_encoder_kernel(%arg0: i32, %arg1: memref<8x100xf32, #tpu.memory_space<vmem>>, %arg2: memref<100x128xbf16, #tpu.memory_space<vmem>>, %arg3: memref<1x128xf32, #tpu.memory_space<vmem>>, %arg4: memref<128x128xbf16, #tpu.memory_space<vmem>>, %arg5: memref<1x128xf32, #tpu.memory_space<vmem>>, %arg6: memref<128x10xbf16, #tpu.memory_space<vmem>>, %arg7: memref<1x10xf32, #tpu.memory_space<vmem>>, %arg8: memref<8x10xf32, #tpu.memory_space<vmem>>) attributes {dimension_semantics = [#tpu.dimension_semantics<parallel>], iteration_bounds = array<i64: 1>, scalar_prefetch = 0 : i64, scratch_operands = 0 : i64, tpu.core_type = #tpu.core_type<tc>, window_params = [{transform_indices = @transform_0, window_bounds = array<i64: 8, 100>}, {pipeline_mode = #tpu.pipeline_mode<synchronous>, transform_indices = @transform_1, window_bounds = array<i64: 100, 128>}, {pipeline_mode = #tpu.pipeline_mode<synchronous>, transform_indices = @transform_2, window_bounds = array<i64: 1, 128>}, {pipeline_mode = #tpu.pipeline_mode<synchronous>, transform_indices = @transform_3, window_bounds = array<i64: 128, 128>}, {pipeline_mode = #tpu.pipeline_mode<synchronous>, transform_indices = @transform_4, window_bounds = array<i64: 1, 128>}, {pipeline_mode = #tpu.pipeline_mode<synchronous>, transform_indices = @transform_5, window_bounds = array<i64: 128, 10>}, {pipeline_mode = #tpu.pipeline_mode<synchronous>, transform_indices = @transform_6, window_bounds = array<i64: 1, 10>}, {transform_indices = @transform_7, window_bounds = array<i64: 8, 10>}]} {
    %c0 = arith.constant 0 : index
    %c0_0 = arith.constant 0 : index
    %0 = vector.load %arg1[%c0, %c0_0] : memref<8x100xf32, #tpu.memory_space<vmem>>, vector<8x100xf32>
    %1 = arith.truncf %0 : vector<8x100xf32> to vector<8x100xbf16>
    %c0_1 = arith.constant 0 : index
    %c0_2 = arith.constant 0 : index
    %2 = vector.load %arg2[%c0_1, %c0_2] : memref<100x128xbf16, #tpu.memory_space<vmem>>, vector<100x128xbf16>
    %cst = arith.constant dense<0.000000e+00> : vector<8x128xf32>
    %3 = tpu.matmul %1, %2, %cst {dimension_numbers = #tpu.dot_dimension_numbers<[1], [0], [0], [1], [0, 0, 1, 1], [], []>} : vector<8x100xbf16>, vector<100x128xbf16>, vector<8x128xf32> -> vector<8x128xf32>
    %c0_3 = arith.constant 0 : index
    %c0_4 = arith.constant 0 : index
    %4 = vector.load %arg3[%c0_3, %c0_4] : memref<1x128xf32, #tpu.memory_space<vmem>>, vector<1x128xf32>
    %5 = vector.broadcast %4 : vector<1x128xf32> to vector<8x128xf32>
    %6 = arith.addf %3, %5 : vector<8x128xf32>
    %cst_5 = arith.constant 0.000000e+00 : f32
    %7 = vector.broadcast %cst_5 : f32 to vector<8x128xf32>
    %8 = arith.maximumf %6, %7 : vector<8x128xf32>
    %9 = arith.truncf %8 : vector<8x128xf32> to vector<8x128xbf16>
    %c0_6 = arith.constant 0 : index
    %c0_7 = arith.constant 0 : index
    %10 = vector.load %arg4[%c0_6, %c0_7] : memref<128x128xbf16, #tpu.memory_space<vmem>>, vector<128x128xbf16>
    %cst_8 = arith.constant dense<0.000000e+00> : vector<8x128xf32>
    %11 = tpu.matmul %9, %10, %cst_8 {dimension_numbers = #tpu.dot_dimension_numbers<[1], [0], [0], [1], [0, 0, 1, 1], [], []>} : vector<8x128xbf16>, vector<128x128xbf16>, vector<8x128xf32> -> vector<8x128xf32>
    %c0_9 = arith.constant 0 : index
    %c0_10 = arith.constant 0 : index
    %12 = vector.load %arg5[%c0_9, %c0_10] : memref<1x128xf32, #tpu.memory_space<vmem>>, vector<1x128xf32>
    %13 = vector.broadcast %12 : vector<1x128xf32> to vector<8x128xf32>
    %14 = arith.addf %11, %13 : vector<8x128xf32>
    %cst_11 = arith.constant 0.000000e+00 : f32
    %15 = vector.broadcast %cst_11 : f32 to vector<8x128xf32>
    %16 = arith.maximumf %14, %15 : vector<8x128xf32>
    %17 = arith.truncf %16 : vector<8x128xf32> to vector<8x128xbf16>
    %c0_12 = arith.constant 0 : index
    %c0_13 = arith.constant 0 : index
    %18 = vector.load %arg6[%c0_12, %c0_13] : memref<128x10xbf16, #tpu.memory_space<vmem>>, vector<128x10xbf16>
    %cst_14 = arith.constant dense<0.000000e+00> : vector<8x10xf32>
    %19 = tpu.matmul %17, %18, %cst_14 {dimension_numbers = #tpu.dot_dimension_numbers<[1], [0], [0], [1], [0, 0, 1, 1], [], []>} : vector<8x128xbf16>, vector<128x10xbf16>, vector<8x10xf32> -> vector<8x10xf32>
    %c0_15 = arith.constant 0 : index
    %c0_16 = arith.constant 0 : index
    %20 = vector.load %arg7[%c0_15, %c0_16] : memref<1x10xf32, #tpu.memory_space<vmem>>, vector<1x10xf32>
    %21 = vector.broadcast %20 : vector<1x10xf32> to vector<8x10xf32>
    %22 = arith.addf %19, %21 : vector<8x10xf32>
    %cst_17 = arith.constant 0.000000e+00 : f32
    %23 = vector.broadcast %cst_17 : f32 to vector<8x10xf32>
    %24 = arith.maximumf %22, %23 : vector<8x10xf32>
    %c0_18 = arith.constant 0 : index
    %c0_19 = arith.constant 0 : index
    %25 = vector.load %arg8[%c0_18, %c0_19] : memref<8x10xf32, #tpu.memory_space<vmem>>, vector<8x10xf32>
    tpu.vector_store %arg8[%c0_18, %c0_19], %24 {strides = array<i32>} : memref<8x10xf32, #tpu.memory_space<vmem>>, vector<8x10xf32>,
    return
  }
  func.func @transform_0(%arg0: i32) -> (i32, i32) {
    %c0_i32 = arith.constant 0 : i32
    %c0_i32_0 = arith.constant 0 : i32
    return %arg0, %c0_i32 : i32, i32
  }
  func.func @transform_1(%arg0: i32) -> (i32, i32) {
    %c0_i32 = arith.constant 0 : i32
    %c0_i32_0 = arith.constant 0 : i32
    %c0_i32_1 = arith.constant 0 : i32
    return %c0_i32, %c0_i32_0 : i32, i32
  }
  func.func @transform_2(%arg0: i32) -> (i32, i32) {
    %c0_i32 = arith.constant 0 : i32
    %c0_i32_0 = arith.constant 0 : i32
    %c0_i32_1 = arith.constant 0 : i32
    return %c0_i32, %c0_i32_0 : i32, i32
  }
  func.func @transform_3(%arg0: i32) -> (i32, i32) {
    %c0_i32 = arith.constant 0 : i32
    %c0_i32_0 = arith.constant 0 : i32
    %c0_i32_1 = arith.constant 0 : i32
    return %c0_i32, %c0_i32_0 : i32, i32
  }
  func.func @transform_4(%arg0: i32) -> (i32, i32) {
    %c0_i32 = arith.constant 0 : i32
    %c0_i32_0 = arith.constant 0 : i32
    %c0_i32_1 = arith.constant 0 : i32
    return %c0_i32, %c0_i32_0 : i32, i32
  }
  func.func @transform_5(%arg0: i32) -> (i32, i32) {
    %c0_i32 = arith.constant 0 : i32
    %c0_i32_0 = arith.constant 0 : i32
    %c0_i32_1 = arith.constant 0 : i32
    return %c0_i32, %c0_i32_0 : i32, i32
  }
  func.func @transform_6(%arg0: i32) -> (i32, i32) {
    %c0_i32 = arith.constant 0 : i32
    %c0_i32_0 = arith.constant 0 : i32
    %c0_i32_1 = arith.constant 0 : i32
    return %c0_i32, %c0_i32_0 : i32, i32
  }
  func.func @transform_7(%arg0: i32) -> (i32, i32) {
    %c0_i32 = arith.constant 0 : i32
    %c0_i32_0 = arith.constant 0 : i32
    return %arg0, %c0_i32 : i32, i32
  }
}

</mosaic_0001>

<llo_original>
// kernel: encoder_forward.1
$region0: #{encoder_forward.1}
  #allocation0 [shape = 'u32[]', space=smem, size = 0x4, offset = 0x4, fixed_abs, tag = 'smem constant byte address 0x4 - core index']
  #allocation1 [shape = 'u32[144,128]{1,0:T(1,128)}', space=vmem, size = 0x12000, scoped, tag = 'internal scratch']
  %s0 = inlined_call_operand.vmem [shape: f32[8,100], index: 0, kind: input, shape index: {}]
  %s1 = inlined_call_operand.vmem [shape: bf16[100,128], index: 1, kind: input, shape index: {}]
  %s2 = inlined_call_operand.vmem [shape: f32[1,128], index: 2, kind: input, shape index: {}]
  %s3 = inlined_call_operand.vmem [shape: bf16[128,128], index: 3, kind: input, shape index: {}]
  %s4 = inlined_call_operand.vmem [shape: f32[1,128], index: 4, kind: input, shape index: {}]
  %s5 = inlined_call_operand.vmem [shape: bf16[128,10], index: 5, kind: input, shape index: {}]
  %s6 = inlined_call_operand.vmem [shape: f32[1,10], index: 6, kind: input, shape index: {}]
  %s7 = inlined_call_operand.hbm [shape: f32[8,10], index: 7, kind: output, shape index: {}]
  %s8 = sld [smem:[#allocation0]]
  $region38: #{encoder_forward.1} parent=0
    _
  %s10 = ssub.s32 1, %s8
  %s11 = scalar_select 0, %s10, %s8
  $region1: #{encoder_forward.1} parent=0
    #allocation2 [shape = 'u8[4096]{0}', space=vmem, size = 0x1000, scoped, tag = 'output window, operand 0, single buffered']
    #allocation3 [shape = 's32[1]{0}', space=sflag, size = 0x4, scoped, tag = 'scoped memory for encoder_forward.1']
    %12 = vsyncpa [#allocation3], 0
    // Predicated region
    $region2: #{encoder_forward.1} parent=1 // pred_check
      _
    $region3: #{encoder_forward.1} parent=1 // pred_check_branch
      %14 = sbr.rel (0) target = $region5
    $region4: #{encoder_forward.1} parent=1 // pred_region
      _
    $region5: #{encoder_forward.1} parent=1 // pred_fallthru
      _
    // Predicated region
    $region6: #{encoder_forward.1} parent=1 // pred_check
      _
    $region7: #{encoder_forward.1} parent=1 // pred_check_branch
      %16 = sbr.rel (0) target = $region9
    $region8: #{encoder_forward.1} parent=1 // pred_region
      _
    $region9: #{encoder_forward.1} parent=1 // pred_fallthru
      _
    // Predicated region
    $region10: #{encoder_forward.1} parent=1 // pred_check
      _
    $region11: #{encoder_forward.1} parent=1 // pred_check_branch
      %18 = sbr.rel (0) target = $region13
    $region12: #{encoder_forward.1} parent=1 // pred_region
      _
    $region13: #{encoder_forward.1} parent=1 // pred_fallthru
      _
    // Predicated region
    $region14: #{encoder_forward.1} parent=1 // pred_check
      _
    $region15: #{encoder_forward.1} parent=1 // pred_check_branch
      %20 = sbr.rel (0) target = $region17
    $region16: #{encoder_forward.1} parent=1 // pred_region
      _
    $region17: #{encoder_forward.1} parent=1 // pred_fallthru
      _
    // Predicated region
    $region18: #{encoder_forward.1} parent=1 // pred_check
      _
    $region19: #{encoder_forward.1} parent=1 // pred_check_branch
      %22 = sbr.rel (0) target = $region21
    $region20: #{encoder_forward.1} parent=1 // pred_region
      _
    $region21: #{encoder_forward.1} parent=1 // pred_fallthru
      _
    // Predicated region
    $region22: #{encoder_forward.1} parent=1 // pred_check
      _
    $region23: #{encoder_forward.1} parent=1 // pred_check_branch
      %24 = sbr.rel (0) target = $region25
    $region24: #{encoder_forward.1} parent=1 // pred_region
      _
    $region25: #{encoder_forward.1} parent=1 // pred_fallthru
      _
    // Predicated region
    $region26: #{encoder_forward.1} parent=1 // pred_check
      _
    $region27: #{encoder_forward.1} parent=1 // pred_check_branch
      %26 = sbr.rel (0) target = $region29
    $region28: #{encoder_forward.1} parent=1 // pred_region
      _
    $region29: #{encoder_forward.1} parent=1 // pred_fallthru
      _
    %v28 = vld [vmem:[%s0] sm:$0xff]
    %v29 = vpack.c.bf16 %v28, %v28
    %v30 = vld [vmem:[%s1] sm:$0xf]
    %v31 = vld [vmem:[%s1 + $0x4] sm:$0xf]
    %v32 = vld [vmem:[%s1 + $0x8] sm:$0xf]
    %v33 = vld [vmem:[%s1 + $0xc] sm:$0xf]
    %v34 = vld [vmem:[%s1 + $0x10] sm:$0xf]
    %v35 = vld [vmem:[%s1 + $0x14] sm:$0xf]
    %v36 = vld [vmem:[%s1 + $0x18] sm:$0xf]
    %v37 = vld [vmem:[%s1 + $0x1c] sm:$0xf]
    %v38 = vld [vmem:[%s1 + $0x20] sm:$0xf]
    %v39 = vld [vmem:[%s1 + $0x24] sm:$0xf]
    %v40 = vld [vmem:[%s1 + $0x28] sm:$0xf]
    %v41 = vld [vmem:[%s1 + $0x2c] sm:$0xf]
    %v42 = vld [vmem:[%s1 + $0x30] sm:$0x3]
    %v43 = vld [vmem:[%s2] sm:$0x1]
    %v45 = vlaneseq
    %v46 = vshrl.u32 %v45, 7
    %v47 = vsub.s32 0, %v46
    %v48 = vrot.slane %v43, %v47
    %v63 = vunpack.c.l.b16 %v30
    %v64 = vunpack.c.l.b16 %v31
    %v65 = vunpack.c.l.b16 %v32
    %v66 = vunpack.c.l.b16 %v33
    %v67 = vunpack.c.l.b16 %v34
    %v68 = vunpack.c.l.b16 %v35
    %v69 = vunpack.c.l.b16 %v36
    %v70 = vunpack.c.l.b16 %v37
    %v71 = vunpack.c.l.b16 %v38
    %v72 = vunpack.c.l.b16 %v39
    %v73 = vunpack.c.l.b16 %v40
    %v74 = vunpack.c.l.b16 %v41
    %v75 = vunpack.c.l.b16 %v42
    %v76 = vpack.c.b16 %v64, %v63
    %v77 = vpack.c.b16 %v66, %v65
    %v78 = vpack.c.b16 %v68, %v67
    %v79 = vpack.c.b16 %v70, %v69
    %v80 = vpack.c.b16 %v72, %v71
    %v81 = vpack.c.b16 %v74, %v73
    %v82 = vpack.c.b16 %v75, %v75
    %vm89 = vcmask 818176
    %v91 = vsel %vm89, %v29, 0
    %vm93 = vcmask 1041408
    %v95 = vsel %vm93, %v82, 0
    %97 = vmatprep.subr.bf16.mxu0 0
    %98 = vmatpush1.bf16.msra.mxu0 %v76
    %99 = vmatprep.subr.bf16.mxu0 0
    %100 = vmatpush1.bf16.msra.mxu0 %v77
    %101 = vmatprep.subr.bf16.mxu0 0
    %102 = vmatpush1.bf16.msra.mxu0 %v78
    %103 = vmatprep.subr.bf16.mxu0 0
    %104 = vmatpush1.bf16.msra.mxu0 %v79
    %105 = vmatprep.subr.bf16.mxu0 0
    %106 = vmatpush1.bf16.msra.mxu0 %v80
    %107 = vmatprep.subr.bf16.mxu0 0
    %108 = vmatpush1.bf16.msra.mxu0 %v81
    %109 = vmatprep.subr.bf16.mxu0 0
    %110 = vmatpush1.bf16.msra.mxu0 %v95
    %111 = vmatprep.subr.bf16.mxu0 0
    %112 = vmatpush1.bf16.msra.mxu0 0
    %113 = vmatprep.subr.bf16.mxu0 0
    %114 = vmatpush1.bf16.msra.mxu0 0
    %115 = vmatprep.subr.bf16.mxu0 0
    %116 = vmatpush1.bf16.msra.mxu0 0
    %117 = vmatprep.subr.bf16.mxu0 0
    %118 = vmatpush1.bf16.msra.mxu0 0
    %119 = vmatprep.subr.bf16.mxu0 0
    %120 = vmatpush1.bf16.msra.mxu0 0
    %121 = vmatprep.subr.bf16.mxu0 0
    %122 = vmatpush1.bf16.msra.mxu0 0
    %123 = vmatprep.subr.bf16.mxu0 0
    %124 = vmatpush1.bf16.msra.mxu0 0
    %125 = vmatprep.subr.bf16.mxu0 0
    %126 = vmatpush1.bf16.msra.mxu0 0
    %127 = vmatprep.subr.bf16.mxu0 0
    %128 = vmatpush1.bf16.msra.mxu0 0
    %129 = vmatprep.mubr.bf16.mxu0 0
    %130 = vmatmul.mubr.bf16.gmra.mrb[0].mxu0 %v91
    %v131 = vpop.f32.mrb[0].mxu0
    %v132 = vadd.f32 %v48, %v131
    %v133 = vpop.f32.mrb[0].mxu0
    %v134 = vpop.f32.mrb[0].mxu0
    %v135 = vpop.f32.mrb[0].mxu0
    %136 = vdwg.mxu0
    %v137 = vmax.f32 %v132, 0.0
    %v138 = vpack.c.bf16 %v137, %v137
    %v139 = vld [vmem:[%s3] sm:$0xf]
    %v140 = vld [vmem:[%s3 + $0x4] sm:$0xf]
    %v141 = vld [vmem:[%s3 + $0x8] sm:$0xf]
    %v142 = vld [vmem:[%s3 + $0xc] sm:$0xf]
    %v143 = vld [vmem:[%s3 + $0x10] sm:$0xf]
    %v144 = vld [vmem:[%s3 + $0x14] sm:$0xf]
    %v145 = vld [vmem:[%s3 + $0x18] sm:$0xf]
    %v146 = vld [vmem:[%s3 + $0x1c] sm:$0xf]
    %v147 = vld [vmem:[%s3 + $0x20] sm:$0xf]
    %v148 = vld [vmem:[%s3 + $0x24] sm:$0xf]
    %v149 = vld [vmem:[%s3 + $0x28] sm:$0xf]
    %v150 = vld [vmem:[%s3 + $0x2c] sm:$0xf]
    %v151 = vld [vmem:[%s3 + $0x30] sm:$0xf]
    %v152 = vld [vmem:[%s3 + $0x34] sm:$0xf]
    %v153 = vld [vmem:[%s3 + $0x38] sm:$0xf]
    %v154 = vld [vmem:[%s3 + $0x3c] sm:$0xf]
    %v155 = vld [vmem:[%s4] sm:$0x1]
    %v157 = vlaneseq
    %v158 = vshrl.u32 %v157, 7
    %v159 = vsub.s32 0, %v158
    %v160 = vrot.slane %v155, %v159
    %v178 = vunpack.c.l.b16 %v139
    %v179 = vunpack.c.l.b16 %v140
    %v180 = vunpack.c.l.b16 %v141
    %v181 = vunpack.c.l.b16 %v142
    %v182 = vunpack.c.l.b16 %v143
    %v183 = vunpack.c.l.b16 %v144
    %v184 = vunpack.c.l.b16 %v145
    %v185 = vunpack.c.l.b16 %v146
    %v186 = vunpack.c.l.b16 %v147
    %v187 = vunpack.c.l.b16 %v148
    %v188 = vunpack.c.l.b16 %v149
    %v189 = vunpack.c.l.b16 %v150
    %v190 = vunpack.c.l.b16 %v151
    %v191 = vunpack.c.l.b16 %v152
    %v192 = vunpack.c.l.b16 %v153
    %v193 = vunpack.c.l.b16 %v154
    %v194 = vpack.c.b16 %v179, %v178
    %v195 = vpack.c.b16 %v181, %v180
    %v196 = vpack.c.b16 %v183, %v182
    %v197 = vpack.c.b16 %v185, %v184
    %v198 = vpack.c.b16 %v187, %v186
    %v199 = vpack.c.b16 %v189, %v188
    %v200 = vpack.c.b16 %v191, %v190
    %v201 = vpack.c.b16 %v193, %v192
    %210 = vmatprep.subr.bf16.mxu0 0
    %211 = vmatpush1.bf16.msra.mxu0 %v194
    %212 = vmatprep.subr.bf16.mxu0 0
    %213 = vmatpush1.bf16.msra.mxu0 %v195
    %214 = vmatprep.subr.bf16.mxu0 0
    %215 = vmatpush1.bf16.msra.mxu0 %v196
    %216 = vmatprep.subr.bf16.mxu0 0
    %217 = vmatpush1.bf16.msra.mxu0 %v197
    %218 = vmatprep.subr.bf16.mxu0 0
    %219 = vmatpush1.bf16.msra.mxu0 %v198
    %220 = vmatprep.subr.bf16.mxu0 0
    %221 = vmatpush1.bf16.msra.mxu0 %v199
    %222 = vmatprep.subr.bf16.mxu0 0
    %223 = vmatpush1.bf16.msra.mxu0 %v200
    %224 = vmatprep.subr.bf16.mxu0 0
    %225 = vmatpush1.bf16.msra.mxu0 %v201
    %226 = vmatprep.subr.bf16.mxu0 0
    %227 = vmatpush1.bf16.msra.mxu0 0
    %228 = vmatprep.subr.bf16.mxu0 0
    %229 = vmatpush1.bf16.msra.mxu0 0
    %230 = vmatprep.subr.bf16.mxu0 0
    %231 = vmatpush1.bf16.msra.mxu0 0
    %232 = vmatprep.subr.bf16.mxu0 0
    %233 = vmatpush1.bf16.msra.mxu0 0
    %234 = vmatprep.subr.bf16.mxu0 0
    %235 = vmatpush1.bf16.msra.mxu0 0
    %236 = vmatprep.subr.bf16.mxu0 0
    %237 = vmatpush1.bf16.msra.mxu0 0
    %238 = vmatprep.subr.bf16.mxu0 0
    %239 = vmatpush1.bf16.msra.mxu0 0
    %240 = vmatprep.subr.bf16.mxu0 0
    %241 = vmatpush1.bf16.msra.mxu0 0
    %242 = vmatprep.mubr.bf16.mxu0 0
    %243 = vmatmul.mubr.bf16.gmra.mrb[0].mxu0 %v138
    %v244 = vpop.f32.mrb[0].mxu0
    %v245 = vadd.f32 %v160, %v244
    %v246 = vpop.f32.mrb[0].mxu0
    %v247 = vpop.f32.mrb[0].mxu0
    %v248 = vpop.f32.mrb[0].mxu0
    %249 = vdwg.mxu0
    %v250 = vmax.f32 %v245, 0.0
    %v251 = vpack.c.bf16 %v250, %v250
    %v252 = vld [vmem:[%s5] sm:$0xf]
    %v253 = vld [vmem:[%s5 + $0x4] sm:$0xf]
    %v254 = vld [vmem:[%s5 + $0x8] sm:$0xf]
    %v255 = vld [vmem:[%s5 + $0xc] sm:$0xf]
    %v256 = vld [vmem:[%s5 + $0x10] sm:$0xf]
    %v257 = vld [vmem:[%s5 + $0x14] sm:$0xf]
    %v258 = vld [vmem:[%s5 + $0x18] sm:$0xf]
    %v259 = vld [vmem:[%s5 + $0x1c] sm:$0xf]
    %v260 = vld [vmem:[%s5 + $0x20] sm:$0xf]
    %v261 = vld [vmem:[%s5 + $0x24] sm:$0xf]
    %v262 = vld [vmem:[%s5 + $0x28] sm:$0xf]
    %v263 = vld [vmem:[%s5 + $0x2c] sm:$0xf]
    %v264 = vld [vmem:[%s5 + $0x30] sm:$0xf]
    %v265 = vld [vmem:[%s5 + $0x34] sm:$0xf]
    %v266 = vld [vmem:[%s5 + $0x38] sm:$0xf]
    %v267 = vld [vmem:[%s5 + $0x3c] sm:$0xf]
    %v268 = vld [vmem:[%s6] sm:$0x1]
    %v270 = vlaneseq
    %v271 = vshrl.u32 %v270, 7
    %v272 = vsub.s32 0, %v271
    %v273 = vrot.slane %v268, %v272
    %v291 = vunpack.c.l.b16 %v252
    %v292 = vunpack.c.l.b16 %v253
    %v293 = vunpack.c.l.b16 %v254
    %v294 = vunpack.c.l.b16 %v255
    %v295 = vunpack.c.l.b16 %v256
    %v296 = vunpack.c.l.b16 %v257
    %v297 = vunpack.c.l.b16 %v258
    %v298 = vunpack.c.l.b16 %v259
    %v299 = vunpack.c.l.b16 %v260
    %v300 = vunpack.c.l.b16 %v261
    %v301 = vunpack.c.l.b16 %v262
    %v302 = vunpack.c.l.b16 %v263
    %v303 = vunpack.c.l.b16 %v264
    %v304 = vunpack.c.l.b16 %v265
    %v305 = vunpack.c.l.b16 %v266
    %v306 = vunpack.c.l.b16 %v267
    %v307 = vpack.c.b16 %v292, %v291
    %v308 = vpack.c.b16 %v294, %v293
    %v309 = vpack.c.b16 %v296, %v295
    %v310 = vpack.c.b16 %v298, %v297
    %v311 = vpack.c.b16 %v300, %v299
    %v312 = vpack.c.b16 %v302, %v301
    %v313 = vpack.c.b16 %v304, %v303
    %v314 = vpack.c.b16 %v306, %v305
    %323 = vmatprep.subr.bf16.mxu0 0
    %324 = vmatpush1.bf16.msra.mxu0 %v307
    %325 = vmatprep.subr.bf16.mxu0 0
    %326 = vmatpush1.bf16.msra.mxu0 %v308
    %327 = vmatprep.subr.bf16.mxu0 0
    %328 = vmatpush1.bf16.msra.mxu0 %v309
    %329 = vmatprep.subr.bf16.mxu0 0
    %330 = vmatpush1.bf16.msra.mxu0 %v310
    %331 = vmatprep.subr.bf16.mxu0 0
    %332 = vmatpush1.bf16.msra.mxu0 %v311
    %333 = vmatprep.subr.bf16.mxu0 0
    %334 = vmatpush1.bf16.msra.mxu0 %v312
    %335 = vmatprep.subr.bf16.mxu0 0
    %336 = vmatpush1.bf16.msra.mxu0 %v313
    %337 = vmatprep.subr.bf16.mxu0 0
    %338 = vmatpush1.bf16.msra.mxu0 %v314
    %339 = vmatprep.subr.bf16.mxu0 0
    %340 = vmatpush1.bf16.msra.mxu0 0
    %341 = vmatprep.subr.bf16.mxu0 0
    %342 = vmatpush1.bf16.msra.mxu0 0
    %343 = vmatprep.subr.bf16.mxu0 0
    %344 = vmatpush1.bf16.msra.mxu0 0
    %345 = vmatprep.subr.bf16.mxu0 0
    %346 = vmatpush1.bf16.msra.mxu0 0
    %347 = vmatprep.subr.bf16.mxu0 0
    %348 = vmatpush1.bf16.msra.mxu0 0
    %349 = vmatprep.subr.bf16.mxu0 0
    %350 = vmatpush1.bf16.msra.mxu0 0
    %351 = vmatprep.subr.bf16.mxu0 0
    %352 = vmatpush1.bf16.msra.mxu0 0
    %353 = vmatprep.subr.bf16.mxu0 0
    %354 = vmatpush1.bf16.msra.mxu0 0
    %355 = vmatprep.mubr.bf16.mxu0 0
    %356 = vmatmul.mubr.bf16.gmra.mrb[0].mxu0 %v251
    %v357 = vpop.f32.mrb[0].mxu0
    %v358 = vadd.f32 %v273, %v357
    %v359 = vpop.f32.mrb[0].mxu0
    %v360 = vpop.f32.mrb[0].mxu0
    %v361 = vpop.f32.mrb[0].mxu0
    %362 = vdwg.mxu0
    %v363 = vmax.f32 %v358, 0.0
    %vm364 = vcmask 80896
    %365 = vst.msk [vmem:[#allocation2] sm:$0xff] %vm364, %v363
    // Predicated region
    $region30: #{encoder_forward.1} parent=1 // pred_check
      _
    $region31: #{encoder_forward.1} parent=1 // pred_check_branch
      %367 = sbr.rel (0) target = $region33
    $region32: #{encoder_forward.1} parent=1 // pred_region
      %s369 = ssub.s32 128, 128
      %370 = vsyncadd [#allocation3], %s369
      %s372 = sshll.u32 [#allocation2], 4
      %s373 = int_to_ptr.vmem [resolvable:$true] %s372
      %375 = dma.vmem_to_hbm [thread:$0]  %s373, 128, %s7, [#allocation3]
    $region33: #{encoder_forward.1} parent=1 // pred_fallthru
      _
    // Predicated region
    $region34: #{encoder_forward.1} parent=1 // pred_check
      _
    $region35: #{encoder_forward.1} parent=1 // pred_check_branch
      %377 = sbr.rel (0) target = $region37
    $region36: #{encoder_forward.1} parent=1 // pred_region
      %378 = dma.done [#allocation3], 128
    $region37: #{encoder_forward.1} parent=1 // pred_fallthru
      _
    %379 = vsyncpa [#allocation3], 1

</llo_original>
